<compile_context>
chip_gen: v6e
topology: v6e:2x2x1
jax: 0.10.0
libtpu: 0.0.40
codegen_flags: <defaults>
</compile_context>

<pallas_src>
import functools

import jax
import jax.numpy as jnp
import numpy as np
from jax.experimental import pallas as pl
from jax.experimental.pallas import tpu as pltpu

PADH = 8  # top padding rows in the scratch; keeps the per-step interior store sublane-aligned


def recurrent_block_kernel(x_ref, m_ref, sel_ref, selT_ref, gb_ref, o_ref, pad_ref,
                           *, t, eps, inv_cnt):
    H, L = x_ref.shape            # L = N * W * C (lane-dense; 128 for the test shape)

    # One-time init: zero the padded scratch (only the two halo rows adjacent to the interior
    # are ever read, but a single full zero store is cheaper than being clever) and the
    # recurrent carry (o_ref doubles as y_{step-1}; step 0 then computes CB(x + 0) = CB(x)).
    pad_ref[...] = jnp.zeros(pad_ref.shape, jnp.float32)
    o_ref[...] = jnp.zeros((H, L), jnp.float32)

    def step(_i, carry):
        # Recurrent input: x for step 0 (carry is zero), x + x1 afterwards.
        cur = x_ref[...] + o_ref[...]
        # Interior rewrite: full-lane, sublane-tile-aligned (rows 8..8+H-1), unmasked store.
        pad_ref[PADH:PADH + H, :] = cur

        # ---- 3x3 conv, stride 1, pad 1: three MXU matmuls (one per ky).
        # m_ref[ky] is (L, L): banded over w (implements the W zero padding), block-diagonal
        # over the folded batch, and contracts ci -> co.  The H zero padding comes from the
        # zeroed halo rows of pad_ref.
        acc = jnp.dot(pad_ref[PADH - 1:PADH - 1 + H, :], m_ref[0],
                      preferred_element_type=jnp.float32)
        acc = acc + jnp.dot(pad_ref[PADH:PADH + H, :], m_ref[1],
                            preferred_element_type=jnp.float32)
        acc = acc + jnp.dot(pad_ref[PADH + 1:PADH + 1 + H, :], m_ref[2],
                            preferred_element_type=jnp.float32)

        # ---- BatchNorm2d (training-mode biased batch stats) folded into one scale+shift.
        # Conv bias omitted: exactly cancelled by the mean subtraction.
        # Sum & sum-of-squares share one (2, L) x (L, C) one-hot matmul; scale & shift share
        # one (2, C) x (C, L) broadcast back to lanes.
        # NOTE: var = E[y^2] - E[y]^2; fine for O(1) activations in f32.
        # TODO(synk): switch to a shifted two-pass variance for production weight scales.
        s_lane = jnp.sum(acc, axis=0, keepdims=True)             # (1, L)
        ss_lane = jnp.sum(acc * acc, axis=0, keepdims=True)      # (1, L)
        stats = jnp.dot(jnp.concatenate([s_lane, ss_lane], axis=0), sel_ref[...],
                        preferred_element_type=jnp.float32)      # (2, C) = [sum; sumsq]
        mean_c = stats[0:1, :] * inv_cnt
        var_c = stats[1:2, :] * inv_cnt - mean_c * mean_c
        scale_c = gb_ref[0:1, :] * jax.lax.rsqrt(var_c + eps)    # gamma / sqrt(var + eps)
        shift_c = gb_ref[1:2, :] - mean_c * scale_c              # beta - mean * scale
        sc_sh = jnp.dot(jnp.concatenate([scale_c, shift_c], axis=0), selT_ref[...],
                        preferred_element_type=jnp.float32)      # (2, L)

        # act='relu'; lane-dense unmasked store; o_ref carries y into the next step.
        o_ref[...] = jnp.maximum(acc * sc_sh[0:1, :] + sc_sh[1:2, :], 0.0)
        return carry

    if t <= 3:   # small static t: unrolled python loop keeps full LLO scheduling visibility
        for i in range(t):
            step(i, 0)
    else:        # larger t: bounded live ranges
        jax.lax.fori_loop(0, t, step, 0)


def recurrent_block(x_nchw, weight_oihw, bias, gamma, beta, *, t, eps=1e-5):
    """x_nchw: (N, C, H, W) like PyTorch; returns (N, C, H, W)."""
    del bias  # conv bias is exactly cancelled by the train-mode BN mean subtraction
    N, C, H, W = x_nchw.shape
    WC = W * C
    L = N * WC  # lane axis; equals 128 for the (2, 4, 16, 16) test shape (fully dense vregs)

    # NCHW -> (H, N, W, C) -> lane-dense (H, N*W*C); the reshape is layout-preserving.
    x = jnp.transpose(x_nchw, (2, 0, 3, 1)).astype(jnp.float32).reshape(H, L)

    # PyTorch conv weight (O, I, kH, kW) -> HWIO (ky, kx, ci, co).
    w_hwio = jnp.transpose(weight_oihw, (2, 3, 1, 0)).astype(jnp.float32)

    # Banded per-ky mix matrices:
    #   m_img[ky, wi*C + ci, wo*C + co] = W[ky, wi - wo + 1, ci, co] when |wi - wo| <= 1,
    # zero elsewhere (the band edges implement the conv zero-padding in W), then made
    # block-diagonal over the N batch images folded into the lane axis.
    wi_g, ci_g, wo_g, co_g = np.meshgrid(np.arange(W), np.arange(C),
                                         np.arange(W), np.arange(C), indexing="ij")
    kx_g = wi_g - wo_g + 1
    valid = (kx_g >= 0) & (kx_g <= 2)
    rows = (wi_g * C + ci_g)[valid]
    cols = (wo_g * C + co_g)[valid]
    m_img = jnp.zeros((3, WC, WC), jnp.float32).at[:, rows, cols].set(
        w_hwio[:, kx_g[valid], ci_g[valid], co_g[valid]])
    m_full = jnp.einsum("ab,kij->kaibj", jnp.eye(N, dtype=jnp.float32),
                        m_img).reshape(3, L, L)

    # One-hot channel selectors: lane sums -> per-channel, per-channel -> lanes (channel of
    # lane l is l % C in this layout).
    lane_ch = np.arange(L) % C
    sel = jnp.asarray((lane_ch[:, None] == np.arange(C)[None, :]).astype(np.float32))  # (L, C)
    selT = sel.T                                                                        # (C, L)

    gb = jnp.stack([gamma.astype(jnp.float32), beta.astype(jnp.float32)]).reshape(2, C)

    kernel = functools.partial(recurrent_block_kernel, t=t, eps=eps,
                               inv_cnt=1.0 / float(N * H * W))
    vmem = pl.BlockSpec(memory_space=pltpu.MemorySpace.VMEM)
    # TODO(synk): add a grid over H/N tiles with parallel dimension_semantics + a two-pass
    #             cross-tile BN for production shapes (v7x 64 MiB VMEM, 2 TensorCores).
    out = pl.pallas_call(
        kernel,
        out_shape=jax.ShapeDtypeStruct((H, L), jnp.float32),
        in_specs=[vmem] * 5,
        out_specs=vmem,
        scratch_shapes=[pltpu.VMEM((H + 2 * PADH, L), jnp.float32)],
    )(x, m_full, sel, selT, gb)
    return jnp.transpose(out.reshape(H, N, W, C), (1, 3, 0, 2))  # back to NCHW


def _reference(x_nchw, weight_oihw, bias, gamma, beta, *, t, eps=1e-5):
    """Pure-JAX (XLA) reference with identical semantics, for a sanity check."""
    x = jnp.transpose(x_nchw, (0, 2, 3, 1)).astype(jnp.float32)
    w = jnp.transpose(weight_oihw, (2, 3, 1, 0)).astype(jnp.float32)   # HWIO

    def convblock(inp):
        y = jax.lax.conv_general_dilated(
            inp, w, window_strides=(1, 1), padding=((1, 1), (1, 1)),
            dimension_numbers=('NHWC', 'HWIO', 'NHWC'))
        y = y + bias
        mean = y.mean(axis=(0, 1, 2))
        var = y.var(axis=(0, 1, 2))
        y = (y - mean) * jax.lax.rsqrt(var + eps) * gamma + beta
        return jnp.maximum(y, 0.0)

    x1 = convblock(x)
    for _ in range(1, t):
        x1 = convblock(x + x1)
    return jnp.transpose(x1, (0, 3, 1, 2))


if __name__ == "__main__":
    key = jax.random.PRNGKey(0)
    N, C, H, W = 2, 4, 16, 16      # RecurrentBlock(out_channels=4, t=2, act='relu')
    t = 2

    k1, k2, k3 = jax.random.split(key, 3)
    x = jax.random.normal(k1, (N, C, H, W), jnp.float32)
    fan_in = C * 3 * 3
    bound = 1.0 / (fan_in ** 0.5)
    weight = jax.random.uniform(k2, (C, C, 3, 3), jnp.float32, -bound, bound)
    bias = jax.random.uniform(k3, (C,), jnp.float32, -bound, bound)
    gamma = jnp.ones((C,), jnp.float32)   # BatchNorm2d default affine init
    beta = jnp.zeros((C,), jnp.float32)

    out = recurrent_block(x, weight, bias, gamma, beta, t=t)
    out = jax.block_until_ready(out)

    ref = jax.block_until_ready(_reference(x, weight, bias, gamma, beta, t=t))
    assert out.shape == (N, C, H, W)
    assert jnp.allclose(out, ref, atol=1e-4, rtol=1e-4), \
        f"max abs err {jnp.max(jnp.abs(out - ref))}"

    print("KERNEL_OK")
</pallas_src>

<mosaic_0001>
module attributes {stable_mosaic.version = 11 : i64} {
  func.func @recurrent_block_kernel(%arg0: memref<16x128xf32, #tpu.memory_space<vmem>>, %arg1: memref<3x128x128xf32, #tpu.memory_space<vmem>>, %arg2: memref<128x4xf32, #tpu.memory_space<vmem>>, %arg3: memref<4x128xf32, #tpu.memory_space<vmem>>, %arg4: memref<2x4xf32, #tpu.memory_space<vmem>>, %arg5: memref<16x128xf32, #tpu.memory_space<vmem>>, %arg6: memref<32x128xf32, #tpu.memory_space<vmem>>) attributes {dimension_semantics = [], scalar_prefetch = 0 : i64, scratch_operands = 1 : i64, tpu.core_type = #tpu.core_type<tc>} {
    %cst = arith.constant 0.000000e+00 : f32
    %0 = vector.broadcast %cst : f32 to vector<32x128xf32>
    %c0 = arith.constant 0 : index
    %c0_0 = arith.constant 0 : index
    %1 = vector.load %arg6[%c0, %c0_0] : memref<32x128xf32, #tpu.memory_space<vmem>>, vector<32x128xf32>
    tpu.vector_store %arg6[%c0, %c0_0], %0 {strides = array<i32>} : memref<32x128xf32, #tpu.memory_space<vmem>>, vector<32x128xf32>,
    %cst_1 = arith.constant 0.000000e+00 : f32
    %2 = vector.broadcast %cst_1 : f32 to vector<16x128xf32>
    %c0_2 = arith.constant 0 : index
    %c0_3 = arith.constant 0 : index
    %3 = vector.load %arg5[%c0_2, %c0_3] : memref<16x128xf32, #tpu.memory_space<vmem>>, vector<16x128xf32>
    tpu.vector_store %arg5[%c0_2, %c0_3], %2 {strides = array<i32>} : memref<16x128xf32, #tpu.memory_space<vmem>>, vector<16x128xf32>,
    %c0_4 = arith.constant 0 : index
    %c0_5 = arith.constant 0 : index
    %4 = vector.load %arg0[%c0_4, %c0_5] : memref<16x128xf32, #tpu.memory_space<vmem>>, vector<16x128xf32>
    %c0_6 = arith.constant 0 : index
    %c0_7 = arith.constant 0 : index
    %5 = vector.load %arg5[%c0_6, %c0_7] : memref<16x128xf32, #tpu.memory_space<vmem>>, vector<16x128xf32>
    %6 = arith.addf %4, %5 : vector<16x128xf32>
    %c8 = arith.constant 8 : index
    %c0_8 = arith.constant 0 : index
    %7 = vector.load %arg6[%c8, %c0_8] : memref<32x128xf32, #tpu.memory_space<vmem>>, vector<16x128xf32>
    tpu.vector_store %arg6[%c8, %c0_8], %6 {strides = array<i32>} : memref<32x128xf32, #tpu.memory_space<vmem>>, vector<16x128xf32>,
    %c7 = arith.constant 7 : index
    %c0_9 = arith.constant 0 : index
    %8 = vector.load %arg6[%c7, %c0_9] : memref<32x128xf32, #tpu.memory_space<vmem>>, vector<16x128xf32>
    %c0_10 = arith.constant 0 : index
    %c0_11 = arith.constant 0 : index
    %c0_12 = arith.constant 0 : index
    %9 = vector.load %arg1[%c0_10, %c0_11, %c0_12] : memref<3x128x128xf32, #tpu.memory_space<vmem>>, vector<1x128x128xf32>
    %10 = vector.shape_cast %9 : vector<1x128x128xf32> to vector<128x128xf32>
    %cst_13 = arith.constant dense<0.000000e+00> : vector<16x128xf32>
    %11 = tpu.matmul %8, %10, %cst_13 {dimension_numbers = #tpu.dot_dimension_numbers<[1], [0], [0], [1], [0, 0, 1, 1], [], []>} : vector<16x128xf32>, vector<128x128xf32>, vector<16x128xf32> -> vector<16x128xf32>
    %c8_14 = arith.constant 8 : index
    %c0_15 = arith.constant 0 : index
    %12 = vector.load %arg6[%c8_14, %c0_15] : memref<32x128xf32, #tpu.memory_space<vmem>>, vector<16x128xf32>
    %c1 = arith.constant 1 : index
    %c0_16 = arith.constant 0 : index
    %c0_17 = arith.constant 0 : index
    %13 = vector.load %arg1[%c1, %c0_16, %c0_17] : memref<3x128x128xf32, #tpu.memory_space<vmem>>, vector<1x128x128xf32>
    %14 = vector.shape_cast %13 : vector<1x128x128xf32> to vector<128x128xf32>
    %cst_18 = arith.constant dense<0.000000e+00> : vector<16x128xf32>
    %15 = tpu.matmul %12, %14, %cst_18 {dimension_numbers = #tpu.dot_dimension_numbers<[1], [0], [0], [1], [0, 0, 1, 1], [], []>} : vector<16x128xf32>, vector<128x128xf32>, vector<16x128xf32> -> vector<16x128xf32>
    %16 = arith.addf %11, %15 : vector<16x128xf32>
    %c9 = arith.constant 9 : index
    %c0_19 = arith.constant 0 : index
    %17 = vector.load %arg6[%c9, %c0_19] : memref<32x128xf32, #tpu.memory_space<vmem>>, vector<16x128xf32>
    %c2 = arith.constant 2 : index
    %c0_20 = arith.constant 0 : index
    %c0_21 = arith.constant 0 : index
    %18 = vector.load %arg1[%c2, %c0_20, %c0_21] : memref<3x128x128xf32, #tpu.memory_space<vmem>>, vector<1x128x128xf32>
    %19 = vector.shape_cast %18 : vector<1x128x128xf32> to vector<128x128xf32>
    %cst_22 = arith.constant dense<0.000000e+00> : vector<16x128xf32>
    %20 = tpu.matmul %17, %19, %cst_22 {dimension_numbers = #tpu.dot_dimension_numbers<[1], [0], [0], [1], [0, 0, 1, 1], [], []>} : vector<16x128xf32>, vector<128x128xf32>, vector<16x128xf32> -> vector<16x128xf32>
    %21 = arith.addf %16, %20 : vector<16x128xf32>
    %cst_23 = arith.constant dense<0.000000e+00> : vector<128xf32>
    %22 = vector.multi_reduction <add>, %21, %cst_23 [0] : vector<16x128xf32> to vector<128xf32>
    %23 = vector.shape_cast %22 : vector<128xf32> to vector<1x128xf32>
    %24 = arith.mulf %21, %21 : vector<16x128xf32>
    %cst_24 = arith.constant dense<0.000000e+00> : vector<128xf32>
    %25 = vector.multi_reduction <add>, %24, %cst_24 [0] : vector<16x128xf32> to vector<128xf32>
    %26 = vector.shape_cast %25 : vector<128xf32> to vector<1x128xf32>
    %27 = tpu.concatenate %23, %26 in 0 : vector<1x128xf32>, vector<1x128xf32> -> vector<2x128xf32>
    %c0_25 = arith.constant 0 : index
    %c0_26 = arith.constant 0 : index
    %28 = vector.load %arg2[%c0_25, %c0_26] : memref<128x4xf32, #tpu.memory_space<vmem>>, vector<128x4xf32>
    %cst_27 = arith.constant dense<0.000000e+00> : vector<2x4xf32>
    %29 = tpu.matmul %27, %28, %cst_27 {dimension_numbers = #tpu.dot_dimension_numbers<[1], [0], [0], [1], [0, 0, 1, 1], [], []>} : vector<2x128xf32>, vector<128x4xf32>, vector<2x4xf32> -> vector<2x4xf32>
    %30 = vector.extract_strided_slice %29 {offsets = [0, 0], sizes = [1, 4], strides = [1, 1]} : vector<2x4xf32> to vector<1x4xf32>
    %cst_28 = arith.constant 0.001953125 : f32
    %31 = vector.broadcast %cst_28 : f32 to vector<1x4xf32>
    %32 = arith.mulf %30, %31 : vector<1x4xf32>
    %33 = vector.extract_strided_slice %29 {offsets = [1, 0], sizes = [1, 4], strides = [1, 1]} : vector<2x4xf32> to vector<1x4xf32>
    %cst_29 = arith.constant 0.001953125 : f32
    %34 = vector.broadcast %cst_29 : f32 to vector<1x4xf32>
    %35 = arith.mulf %33, %34 : vector<1x4xf32>
    %36 = arith.mulf %32, %32 : vector<1x4xf32>
    %37 = arith.subf %35, %36 : vector<1x4xf32>
    %c0_30 = arith.constant 0 : index
    %c0_31 = arith.constant 0 : index
    %38 = vector.load %arg4[%c0_30, %c0_31] : memref<2x4xf32, #tpu.memory_space<vmem>>, vector<1x4xf32>
    %cst_32 = arith.constant 9.99999974E-6 : f32
    %39 = vector.broadcast %cst_32 : f32 to vector<1x4xf32>
    %40 = arith.addf %37, %39 : vector<1x4xf32>
    %41 = math.rsqrt %40 : vector<1x4xf32>
    %42 = arith.mulf %38, %41 : vector<1x4xf32>
    %c1_33 = arith.constant 1 : index
    %c0_34 = arith.constant 0 : index
    %43 = vector.load %arg4[%c1_33, %c0_34] : memref<2x4xf32, #tpu.memory_space<vmem>>, vector<1x4xf32>
    %44 = arith.mulf %32, %42 : vector<1x4xf32>
    %45 = arith.subf %43, %44 : vector<1x4xf32>
    %46 = tpu.concatenate %42, %45 in 0 : vector<1x4xf32>, vector<1x4xf32> -> vector<2x4xf32>
    %c0_35 = arith.constant 0 : index
    %c0_36 = arith.constant 0 : index
    %47 = vector.load %arg3[%c0_35, %c0_36] : memref<4x128xf32, #tpu.memory_space<vmem>>, vector<4x128xf32>
    %cst_37 = arith.constant dense<0.000000e+00> : vector<2x128xf32>
    %48 = tpu.matmul %46, %47, %cst_37 {dimension_numbers = #tpu.dot_dimension_numbers<[1], [0], [0], [1], [0, 0, 1, 1], [], []>} : vector<2x4xf32>, vector<4x128xf32>, vector<2x128xf32> -> vector<2x128xf32>
    %49 = vector.extract_strided_slice %48 {offsets = [0, 0], sizes = [1, 128], strides = [1, 1]} : vector<2x128xf32> to vector<1x128xf32>
    %50 = vector.broadcast %49 : vector<1x128xf32> to vector<16x128xf32>
    %51 = arith.mulf %21, %50 : vector<16x128xf32>
    %52 = vector.extract_strided_slice %48 {offsets = [1, 0], sizes = [1, 128], strides = [1, 1]} : vector<2x128xf32> to vector<1x128xf32>
    %53 = vector.broadcast %52 : vector<1x128xf32> to vector<16x128xf32>
    %54 = arith.addf %51, %53 : vector<16x128xf32>
    %cst_38 = arith.constant 0.000000e+00 : f32
    %55 = vector.broadcast %cst_38 : f32 to vector<16x128xf32>
    %56 = arith.maximumf %54, %55 : vector<16x128xf32>
    %c0_39 = arith.constant 0 : index
    %c0_40 = arith.constant 0 : index
    %57 = vector.load %arg5[%c0_39, %c0_40] : memref<16x128xf32, #tpu.memory_space<vmem>>, vector<16x128xf32>
    tpu.vector_store %arg5[%c0_39, %c0_40], %56 {strides = array<i32>} : memref<16x128xf32, #tpu.memory_space<vmem>>, vector<16x128xf32>,
    %c0_41 = arith.constant 0 : index
    %c0_42 = arith.constant 0 : index
    %58 = vector.load %arg0[%c0_41, %c0_42] : memref<16x128xf32, #tpu.memory_space<vmem>>, vector<16x128xf32>
    %c0_43 = arith.constant 0 : index
    %c0_44 = arith.constant 0 : index
    %59 = vector.load %arg5[%c0_43, %c0_44] : memref<16x128xf32, #tpu.memory_space<vmem>>, vector<16x128xf32>
    %60 = arith.addf %58, %59 : vector<16x128xf32>
    %c8_45 = arith.constant 8 : index
    %c0_46 = arith.constant 0 : index
    %61 = vector.load %arg6[%c8_45, %c0_46] : memref<32x128xf32, #tpu.memory_space<vmem>>, vector<16x128xf32>
    tpu.vector_store %arg6[%c8_45, %c0_46], %60 {strides = array<i32>} : memref<32x128xf32, #tpu.memory_space<vmem>>, vector<16x128xf32>,
    %c7_47 = arith.constant 7 : index
    %c0_48 = arith.constant 0 : index
    %62 = vector.load %arg6[%c7_47, %c0_48] : memref<32x128xf32, #tpu.memory_space<vmem>>, vector<16x128xf32>
    %c0_49 = arith.constant 0 : index
    %c0_50 = arith.constant 0 : index
    %c0_51 = arith.constant 0 : index
    %63 = vector.load %arg1[%c0_49, %c0_50, %c0_51] : memref<3x128x128xf32, #tpu.memory_space<vmem>>, vector<1x128x128xf32>
    %64 = vector.shape_cast %63 : vector<1x128x128xf32> to vector<128x128xf32>
    %cst_52 = arith.constant dense<0.000000e+00> : vector<16x128xf32>
    %65 = tpu.matmul %62, %64, %cst_52 {dimension_numbers = #tpu.dot_dimension_numbers<[1], [0], [0], [1], [0, 0, 1, 1], [], []>} : vector<16x128xf32>, vector<128x128xf32>, vector<16x128xf32> -> vector<16x128xf32>
    %c8_53 = arith.constant 8 : index
    %c0_54 = arith.constant 0 : index
    %66 = vector.load %arg6[%c8_53, %c0_54] : memref<32x128xf32, #tpu.memory_space<vmem>>, vector<16x128xf32>
    %c1_55 = arith.constant 1 : index
    %c0_56 = arith.constant 0 : index
    %c0_57 = arith.constant 0 : index
    %67 = vector.load %arg1[%c1_55, %c0_56, %c0_57] : memref<3x128x128xf32, #tpu.memory_space<vmem>>, vector<1x128x128xf32>
    %68 = vector.shape_cast %67 : vector<1x128x128xf32> to vector<128x128xf32>
    %cst_58 = arith.constant dense<0.000000e+00> : vector<16x128xf32>
    %69 = tpu.matmul %66, %68, %cst_58 {dimension_numbers = #tpu.dot_dimension_numbers<[1], [0], [0], [1], [0, 0, 1, 1], [], []>} : vector<16x128xf32>, vector<128x128xf32>, vector<16x128xf32> -> vector<16x128xf32>
    %70 = arith.addf %65, %69 : vector<16x128xf32>
    %c9_59 = arith.constant 9 : index
    %c0_60 = arith.constant 0 : index
    %71 = vector.load %arg6[%c9_59, %c0_60] : memref<32x128xf32, #tpu.memory_space<vmem>>, vector<16x128xf32>
    %c2_61 = arith.constant 2 : index
    %c0_62 = arith.constant 0 : index
    %c0_63 = arith.constant 0 : index
    %72 = vector.load %arg1[%c2_61, %c0_62, %c0_63] : memref<3x128x128xf32, #tpu.memory_space<vmem>>, vector<1x128x128xf32>
    %73 = vector.shape_cast %72 : vector<1x128x128xf32> to vector<128x128xf32>
    %cst_64 = arith.constant dense<0.000000e+00> : vector<16x128xf32>
    %74 = tpu.matmul %71, %73, %cst_64 {dimension_numbers = #tpu.dot_dimension_numbers<[1], [0], [0], [1], [0, 0, 1, 1], [], []>} : vector<16x128xf32>, vector<128x128xf32>, vector<16x128xf32> -> vector<16x128xf32>
    %75 = arith.addf %70, %74 : vector<16x128xf32>
    %cst_65 = arith.constant dense<0.000000e+00> : vector<128xf32>
    %76 = vector.multi_reduction <add>, %75, %cst_65 [0] : vector<16x128xf32> to vector<128xf32>
    %77 = vector.shape_cast %76 : vector<128xf32> to vector<1x128xf32>
    %78 = arith.mulf %75, %75 : vector<16x128xf32>
    %cst_66 = arith.constant dense<0.000000e+00> : vector<128xf32>
    %79 = vector.multi_reduction <add>, %78, %cst_66 [0] : vector<16x128xf32> to vector<128xf32>
    %80 = vector.shape_cast %79 : vector<128xf32> to vector<1x128xf32>
    %81 = tpu.concatenate %77, %80 in 0 : vector<1x128xf32>, vector<1x128xf32> -> vector<2x128xf32>
    %c0_67 = arith.constant 0 : index
    %c0_68 = arith.constant 0 : index
    %82 = vector.load %arg2[%c0_67, %c0_68] : memref<128x4xf32, #tpu.memory_space<vmem>>, vector<128x4xf32>
    %cst_69 = arith.constant dense<0.000000e+00> : vector<2x4xf32>
    %83 = tpu.matmul %81, %82, %cst_69 {dimension_numbers = #tpu.dot_dimension_numbers<[1], [0], [0], [1], [0, 0, 1, 1], [], []>} : vector<2x128xf32>, vector<128x4xf32>, vector<2x4xf32> -> vector<2x4xf32>
    %84 = vector.extract_strided_slice %83 {offsets = [0, 0], sizes = [1, 4], strides = [1, 1]} : vector<2x4xf32> to vector<1x4xf32>
    %cst_70 = arith.constant 0.001953125 : f32
    %85 = vector.broadcast %cst_70 : f32 to vector<1x4xf32>
    %86 = arith.mulf %84, %85 : vector<1x4xf32>
    %87 = vector.extract_strided_slice %83 {offsets = [1, 0], sizes = [1, 4], strides = [1, 1]} : vector<2x4xf32> to vector<1x4xf32>
    %cst_71 = arith.constant 0.001953125 : f32
    %88 = vector.broadcast %cst_71 : f32 to vector<1x4xf32>
    %89 = arith.mulf %87, %88 : vector<1x4xf32>
    %90 = arith.mulf %86, %86 : vector<1x4xf32>
    %91 = arith.subf %89, %90 : vector<1x4xf32>
    %c0_72 = arith.constant 0 : index
    %c0_73 = arith.constant 0 : index
    %92 = vector.load %arg4[%c0_72, %c0_73] : memref<2x4xf32, #tpu.memory_space<vmem>>, vector<1x4xf32>
    %cst_74 = arith.constant 9.99999974E-6 : f32
    %93 = vector.broadcast %cst_74 : f32 to vector<1x4xf32>
    %94 = arith.addf %91, %93 : vector<1x4xf32>
    %95 = math.rsqrt %94 : vector<1x4xf32>
    %96 = arith.mulf %92, %95 : vector<1x4xf32>
    %c1_75 = arith.constant 1 : index
    %c0_76 = arith.constant 0 : index
    %97 = vector.load %arg4[%c1_75, %c0_76] : memref<2x4xf32, #tpu.memory_space<vmem>>, vector<1x4xf32>
    %98 = arith.mulf %86, %96 : vector<1x4xf32>
    %99 = arith.subf %97, %98 : vector<1x4xf32>
    %100 = tpu.concatenate %96, %99 in 0 : vector<1x4xf32>, vector<1x4xf32> -> vector<2x4xf32>
    %c0_77 = arith.constant 0 : index
    %c0_78 = arith.constant 0 : index
    %101 = vector.load %arg3[%c0_77, %c0_78] : memref<4x128xf32, #tpu.memory_space<vmem>>, vector<4x128xf32>
    %cst_79 = arith.constant dense<0.000000e+00> : vector<2x128xf32>
    %102 = tpu.matmul %100, %101, %cst_79 {dimension_numbers = #tpu.dot_dimension_numbers<[1], [0], [0], [1], [0, 0, 1, 1], [], []>} : vector<2x4xf32>, vector<4x128xf32>, vector<2x128xf32> -> vector<2x128xf32>
    %103 = vector.extract_strided_slice %102 {offsets = [0, 0], sizes = [1, 128], strides = [1, 1]} : vector<2x128xf32> to vector<1x128xf32>
    %104 = vector.broadcast %103 : vector<1x128xf32> to vector<16x128xf32>
    %105 = arith.mulf %75, %104 : vector<16x128xf32>
    %106 = vector.extract_strided_slice %102 {offsets = [1, 0], sizes = [1, 128], strides = [1, 1]} : vector<2x128xf32> to vector<1x128xf32>
    %107 = vector.broadcast %106 : vector<1x128xf32> to vector<16x128xf32>
    %108 = arith.addf %105, %107 : vector<16x128xf32>
    %cst_80 = arith.constant 0.000000e+00 : f32
    %109 = vector.broadcast %cst_80 : f32 to vector<16x128xf32>
    %110 = arith.maximumf %108, %109 : vector<16x128xf32>
    %c0_81 = arith.constant 0 : index
    %c0_82 = arith.constant 0 : index
    %111 = vector.load %arg5[%c0_81, %c0_82] : memref<16x128xf32, #tpu.memory_space<vmem>>, vector<16x128xf32>
    tpu.vector_store %arg5[%c0_81, %c0_82], %110 {strides = array<i32>} : memref<16x128xf32, #tpu.memory_space<vmem>>, vector<16x128xf32>,
    return
  }
}

</mosaic_0001>

<llo_original>
// kernel: tpu_custom_call.1
$region0: #{tpu_custom_call.1}
  #allocation0 [shape = 'u32[]', space=smem, size = 0x4, offset = 0x4, fixed_abs, tag = 'smem constant byte address 0x4 - core index']
  #allocation1 [shape = 'u32[144,128]{1,0:T(1,128)}', space=vmem, size = 0x12000, scoped, tag = 'internal scratch']
  #allocation2 [shape = 'f32[32,128]{1,0:T(8,128)}', space=vmem, size = 0x4000, scoped, tag = 'scratch operand']
  %s0 = inlined_call_operand.vmem [shape: f32[16,128], index: 0, kind: input, shape index: {}]
  %s1 = inlined_call_operand.hbm [shape: f32[3,128,128], index: 1, kind: input, shape index: {}]
  %s2 = inlined_call_operand.vmem [shape: f32[128,4], index: 2, kind: input, shape index: {}]
  %s3 = inlined_call_operand.vmem [shape: f32[4,128], index: 3, kind: input, shape index: {}]
  %s4 = inlined_call_operand.vmem [shape: f32[2,4], index: 4, kind: input, shape index: {}]
  %s5 = inlined_call_operand.hbm [shape: f32[16,128], index: 5, kind: output, shape index: {}]
  %s6 = sld [smem:[#allocation0]]
  $region34: #{tpu_custom_call.1} parent=0
    _
  %s8 = ssub.s32 1, %s6
  %s9 = scalar_select 0, %s8, %s6
  $region1: #{tpu_custom_call.1} parent=0
    #allocation3 [shape = 'u8[196608]{0}', space=vmem, size = 0x30000, scoped, tag = 'input window, operand 1, single buffered']
    #allocation4 [shape = 's32[1]{0}', space=sflag, size = 0x4, scoped, tag = 'scoped memory for tpu_custom_call.1']
    #allocation5 [shape = 's32[1]{0}', space=sflag, size = 0x4, scoped, tag = 'scoped memory for tpu_custom_call.1']
    #allocation6 [shape = 'u8[8192]{0}', space=vmem, size = 0x2000, scoped, tag = 'output window, operand 0, single buffered']
    %10 = vsyncpa [#allocation4], 0
    %11 = vsyncpa [#allocation5], 0
    // Predicated region
    $region2: #{tpu_custom_call.1} parent=1 // pred_check
      _
    $region3: #{tpu_custom_call.1} parent=1 // pred_check_branch
      %13 = sbr.rel (0) target = $region5
    $region4: #{tpu_custom_call.1} parent=1 // pred_region
      _
    $region5: #{tpu_custom_call.1} parent=1 // pred_fallthru
      _
    // Predicated region
    $region6: #{tpu_custom_call.1} parent=1 // pred_check
      _
    $region7: #{tpu_custom_call.1} parent=1 // pred_check_branch
      %15 = sbr.rel (0) target = $region9
    $region8: #{tpu_custom_call.1} parent=1 // pred_region
      %s17 = ssub.s32 6144, 6144
      %18 = vsyncadd [#allocation4], %s17
      %s19 = sshll.u32 [#allocation3], 4
      %s20 = int_to_ptr.vmem [resolvable:$true] %s19
      %25 = dma.hbm_to_vmem [thread:$0]  %s1, 6144, %s20, [#allocation4], 128, 128, 8
    $region9: #{tpu_custom_call.1} parent=1 // pred_fallthru
      _
    // Predicated region
    $region10: #{tpu_custom_call.1} parent=1 // pred_check
      _
    $region11: #{tpu_custom_call.1} parent=1 // pred_check_branch
      %27 = sbr.rel (0) target = $region13
    $region12: #{tpu_custom_call.1} parent=1 // pred_region
      _
    $region13: #{tpu_custom_call.1} parent=1 // pred_fallthru
      _
    // Predicated region
    $region14: #{tpu_custom_call.1} parent=1 // pred_check
      _
    $region15: #{tpu_custom_call.1} parent=1 // pred_check_branch
      %29 = sbr.rel (0) target = $region17
    $region16: #{tpu_custom_call.1} parent=1 // pred_region
      _
    $region17: #{tpu_custom_call.1} parent=1 // pred_fallthru
      _
    // Predicated region
    $region18: #{tpu_custom_call.1} parent=1 // pred_check
      _
    $region19: #{tpu_custom_call.1} parent=1 // pred_check_branch
      %31 = sbr.rel (0) target = $region21
    $region20: #{tpu_custom_call.1} parent=1 // pred_region
      _
    $region21: #{tpu_custom_call.1} parent=1 // pred_fallthru
      _
    // Predicated region
    $region22: #{tpu_custom_call.1} parent=1 // pred_check
      _
    $region23: #{tpu_custom_call.1} parent=1 // pred_check_branch
      %33 = sbr.rel (0) target = $region25
    $region24: #{tpu_custom_call.1} parent=1 // pred_region
      %34 = dma.done [#allocation4], 6144
    $region25: #{tpu_custom_call.1} parent=1 // pred_fallthru
      _
    %35 = vst [vmem:[#allocation2] sm:$0xff] 0.0
    %36 = vst [vmem:[#allocation2 + $0x8] sm:$0xff] 0.0
    %37 = vst [vmem:[#allocation2 + $0x10] sm:$0xff] 0.0
    %38 = vst [vmem:[#allocation2 + $0x18] sm:$0xff] 0.0
    %39 = vst [vmem:[#allocation6] sm:$0xff] 0.0
    %40 = vst [vmem:[#allocation6 + $0x8] sm:$0xff] 0.0
    %v41 = vld [vmem:[%s0] sm:$0xff]
    %v42 = vld [vmem:[%s0 + $0x8] sm:$0xff]
    %v43 = vld [vmem:[#allocation6] sm:$0xff]
    %v44 = vld [vmem:[#allocation6 + $0x8] sm:$0xff]
    %v45 = vadd.f32 %v41, %v43
    %v46 = vadd.f32 %v42, %v44
    %47 = vst [vmem:[#allocation2 + $0x8] sm:$0xff] %v45
    %48 = vst [vmem:[#allocation2 + $0x10] sm:$0xff] %v46
    %v49 = vld [vmem:[#allocation2 + $0x7] sm:$0xff]
    %v50 = vld [vmem:[#allocation2 + $0xf] sm:$0xff]
    %v51 = vld [vmem:[#allocation3] sm:$0xff]
    %v52 = vld [vmem:[#allocation3 + $0x8] sm:$0xff]
    %v53 = vld [vmem:[#allocation3 + $0x10] sm:$0xff]
    %v54 = vld [vmem:[#allocation3 + $0x18] sm:$0xff]
    %v55 = vld [vmem:[#allocation3 + $0x20] sm:$0xff]
    %v56 = vld [vmem:[#allocation3 + $0x28] sm:$0xff]
    %v57 = vld [vmem:[#allocation3 + $0x30] sm:$0xff]
    %v58 = vld [vmem:[#allocation3 + $0x38] sm:$0xff]
    %v59 = vld [vmem:[#allocation3 + $0x40] sm:$0xff]
    %v60 = vld [vmem:[#allocation3 + $0x48] sm:$0xff]
    %v61 = vld [vmem:[#allocation3 + $0x50] sm:$0xff]
    %v62 = vld [vmem:[#allocation3 + $0x58] sm:$0xff]
    %v63 = vld [vmem:[#allocation3 + $0x60] sm:$0xff]
    %v64 = vld [vmem:[#allocation3 + $0x68] sm:$0xff]
    %v65 = vld [vmem:[#allocation3 + $0x70] sm:$0xff]
    %v66 = vld [vmem:[#allocation3 + $0x78] sm:$0xff]
    %v67 = vld [vmem:[#allocation2 + $0x8] sm:$0xff]
    %v68 = vld [vmem:[#allocation2 + $0x10] sm:$0xff]
    %s69 = scalar_lea.vmem [#allocation3], 128
    %v70 = vld [vmem:[%s69] sm:$0xff]
    %v71 = vld [vmem:[%s69 + $0x8] sm:$0xff]
    %v72 = vld [vmem:[%s69 + $0x10] sm:$0xff]
    %v73 = vld [vmem:[%s69 + $0x18] sm:$0xff]
    %v74 = vld [vmem:[%s69 + $0x20] sm:$0xff]
    %v75 = vld [vmem:[%s69 + $0x28] sm:$0xff]
    %v76 = vld [vmem:[%s69 + $0x30] sm:$0xff]
    %v77 = vld [vmem:[%s69 + $0x38] sm:$0xff]
    %v78 = vld [vmem:[%s69 + $0x40] sm:$0xff]
    %v79 = vld [vmem:[%s69 + $0x48] sm:$0xff]
    %v80 = vld [vmem:[%s69 + $0x50] sm:$0xff]
    %v81 = vld [vmem:[%s69 + $0x58] sm:$0xff]
    %v82 = vld [vmem:[%s69 + $0x60] sm:$0xff]
    %v83 = vld [vmem:[%s69 + $0x68] sm:$0xff]
    %v84 = vld [vmem:[%s69 + $0x70] sm:$0xff]
    %v85 = vld [vmem:[%s69 + $0x78] sm:$0xff]
    %86 = vmatprep.subr.mxu0 0.0
    %87 = vmatpush1.msra.mxu0 %v85
    %88 = vmatprep.subr.mxu0 0.0
    %89 = vmatpush1.msra.mxu0 %v84
    %90 = vmatprep.subr.mxu0 0.0
    %91 = vmatpush1.msra.mxu0 %v83
    %92 = vmatprep.subr.mxu0 0.0
    %93 = vmatpush1.msra.mxu0 %v82
    %94 = vmatprep.subr.mxu0 0.0
    %95 = vmatpush1.msra.mxu0 %v81
    %96 = vmatprep.subr.mxu0 0.0
    %97 = vmatpush1.msra.mxu0 %v80
    %98 = vmatprep.subr.mxu0 0.0
    %99 = vmatpush1.msra.mxu0 %v79
    %100 = vmatprep.subr.mxu0 0.0
    %101 = vmatpush1.msra.mxu0 %v78
    %102 = vmatprep.subr.mxu0 0.0
    %103 = vmatpush1.msra.mxu0 %v77
    %104 = vmatprep.subr.mxu0 0.0
    %105 = vmatpush1.msra.mxu0 %v76
    %106 = vmatprep.subr.mxu0 0.0
    %107 = vmatpush1.msra.mxu0 %v75
    %108 = vmatprep.subr.mxu0 0.0
    %109 = vmatpush1.msra.mxu0 %v74
    %110 = vmatprep.subr.mxu0 0.0
    %111 = vmatpush1.msra.mxu0 %v73
    %112 = vmatprep.subr.mxu0 0.0
    %113 = vmatpush1.msra.mxu0 %v72
    %114 = vmatprep.subr.mxu0 0.0
    %115 = vmatpush1.msra.mxu0 %v71
    %116 = vmatprep.subr.mxu0 0.0
    %117 = vmatpush1.msra.mxu0 %v70
    %118 = vmatprep.subr.mxu0 0.0
    %119 = vmatpush2.msra.mxu0 0.0
    %120 = vmatprep.subr.mxu0 0.0
    %121 = vmatpush2.msra.mxu0 0.0
    %122 = vmatprep.subr.mxu0 0.0
    %123 = vmatpush2.msra.mxu0 0.0
    %124 = vmatprep.subr.mxu0 0.0
    %125 = vmatpush2.msra.mxu0 0.0
    %126 = vmatprep.subr.mxu0 0.0
    %127 = vmatpush2.msra.mxu0 0.0
    %128 = vmatprep.subr.mxu0 0.0
    %129 = vmatpush2.msra.mxu0 0.0
    %130 = vmatprep.subr.mxu0 0.0
    %131 = vmatpush2.msra.mxu0 0.0
    %132 = vmatprep.subr.mxu0 0.0
    %133 = vmatpush2.msra.mxu0 0.0
    %134 = vmatprep.subr.mxu0 0.0
    %135 = vmatpush2.msra.mxu0 0.0
    %136 = vmatprep.subr.mxu0 0.0
    %137 = vmatpush2.msra.mxu0 0.0
    %138 = vmatprep.subr.mxu0 0.0
    %139 = vmatpush2.msra.mxu0 0.0
    %140 = vmatprep.subr.mxu0 0.0
    %141 = vmatpush2.msra.mxu0 0.0
    %142 = vmatprep.subr.mxu0 0.0
    %143 = vmatpush2.msra.mxu0 0.0
    %144 = vmatprep.subr.mxu0 0.0
    %145 = vmatpush2.msra.mxu0 0.0
    %146 = vmatprep.subr.mxu0 0.0
    %147 = vmatpush2.msra.mxu0 0.0
    %148 = vmatprep.subr.mxu0 0.0
    %149 = vmatpush2.msra.mxu0 0.0
    %150 = vmatprep.mubr.f32.mxu0 0.0
    %151 = vmatmul.mubr.f32.gmra.mxu0 %v67
    %v152 = vpop.f32.mrf.mxu0
    %v153 = vadd.f32 0.0, %v152
    %v154 = vpop.f32.mrf.mxu0
    %155 = vmatprep.mubr.f32.mxu0 0.0
    %156 = vmatmul.mubr.f32.gmra.mxu0 %v68
    %v157 = vpop.f32.mrf.mxu0
    %v158 = vadd.f32 0.0, %v157
    %v159 = vpop.f32.mrf.mxu0
    %160 = vdwg.mxu0
    %161 = vmatprep.subr.mxu0 0.0
    %162 = vmatpush1.msra.mxu0 %v66
    %163 = vmatprep.subr.mxu0 0.0
    %164 = vmatpush1.msra.mxu0 %v65
    %165 = vmatprep.subr.mxu0 0.0
    %166 = vmatpush1.msra.mxu0 %v64
    %167 = vmatprep.subr.mxu0 0.0
    %168 = vmatpush1.msra.mxu0 %v63
    %169 = vmatprep.subr.mxu0 0.0
    %170 = vmatpush1.msra.mxu0 %v62
    %171 = vmatprep.subr.mxu0 0.0
    %172 = vmatpush1.msra.mxu0 %v61
    %173 = vmatprep.subr.mxu0 0.0
    %174 = vmatpush1.msra.mxu0 %v60
    %175 = vmatprep.subr.mxu0 0.0
    %176 = vmatpush1.msra.mxu0 %v59
    %177 = vmatprep.subr.mxu0 0.0
    %178 = vmatpush1.msra.mxu0 %v58
    %179 = vmatprep.subr.mxu0 0.0
    %180 = vmatpush1.msra.mxu0 %v57
    %181 = vmatprep.subr.mxu0 0.0
    %182 = vmatpush1.msra.mxu0 %v56
    %183 = vmatprep.subr.mxu0 0.0
    %184 = vmatpush1.msra.mxu0 %v55
    %185 = vmatprep.subr.mxu0 0.0
    %186 = vmatpush1.msra.mxu0 %v54
    %187 = vmatprep.subr.mxu0 0.0
    %188 = vmatpush1.msra.mxu0 %v53
    %189 = vmatprep.subr.mxu0 0.0
    %190 = vmatpush1.msra.mxu0 %v52
    %191 = vmatprep.subr.mxu0 0.0
    %192 = vmatpush1.msra.mxu0 %v51
    %193 = vmatprep.subr.mxu0 0.0
    %194 = vmatpush2.msra.mxu0 0.0
    %195 = vmatprep.subr.mxu0 0.0
    %196 = vmatpush2.msra.mxu0 0.0
    %197 = vmatprep.subr.mxu0 0.0
    %198 = vmatpush2.msra.mxu0 0.0
    %199 = vmatprep.subr.mxu0 0.0
    %200 = vmatpush2.msra.mxu0 0.0
    %201 = vmatprep.subr.mxu0 0.0
    %202 = vmatpush2.msra.mxu0 0.0
    %203 = vmatprep.subr.mxu0 0.0
    %204 = vmatpush2.msra.mxu0 0.0
    %205 = vmatprep.subr.mxu0 0.0
    %206 = vmatpush2.msra.mxu0 0.0
    %207 = vmatprep.subr.mxu0 0.0
    %208 = vmatpush2.msra.mxu0 0.0
    %209 = vmatprep.subr.mxu0 0.0
    %210 = vmatpush2.msra.mxu0 0.0
    %211 = vmatprep.subr.mxu0 0.0
    %212 = vmatpush2.msra.mxu0 0.0
    %213 = vmatprep.subr.mxu0 0.0
    %214 = vmatpush2.msra.mxu0 0.0
    %215 = vmatprep.subr.mxu0 0.0
    %216 = vmatpush2.msra.mxu0 0.0
    %217 = vmatprep.subr.mxu0 0.0
    %218 = vmatpush2.msra.mxu0 0.0
    %219 = vmatprep.subr.mxu0 0.0
    %220 = vmatpush2.msra.mxu0 0.0
    %221 = vmatprep.subr.mxu0 0.0
    %222 = vmatpush2.msra.mxu0 0.0
    %223 = vmatprep.subr.mxu0 0.0
    %224 = vmatpush2.msra.mxu0 0.0
    %225 = vmatprep.mubr.f32.mxu0 0.0
    %226 = vmatmul.mubr.f32.gmra.mxu0 %v49
    %v227 = vpop.f32.mrf.mxu0
    %v228 = vadd.f32 %v153, %v227
    %v229 = vpop.f32.mrf.mxu0
    %230 = vmatprep.mubr.f32.mxu0 0.0
    %231 = vmatmul.mubr.f32.gmra.mxu0 %v50
    %v232 = vpop.f32.mrf.mxu0
    %v233 = vadd.f32 %v158, %v232
    %v234 = vpop.f32.mrf.mxu0
    %235 = vdwg.mxu0
    %v236 = vld [vmem:[#allocation2 + $0x9] sm:$0xff]
    %v237 = vld [vmem:[#allocation2 + $0x11] sm:$0xff]
    %s238 = scalar_lea.vmem [#allocation3], 256
    %v239 = vld [vmem:[%s238] sm:$0xff]
    %v240 = vld [vmem:[%s238 + $0x8] sm:$0xff]
    %v241 = vld [vmem:[%s238 + $0x10] sm:$0xff]
    %v242 = vld [vmem:[%s238 + $0x18] sm:$0xff]
    %v243 = vld [vmem:[%s238 + $0x20] sm:$0xff]
    %v244 = vld [vmem:[%s238 + $0x28] sm:$0xff]
    %v245 = vld [vmem:[%s238 + $0x30] sm:$0xff]
    %v246 = vld [vmem:[%s238 + $0x38] sm:$0xff]
    %v247 = vld [vmem:[%s238 + $0x40] sm:$0xff]
    %v248 = vld [vmem:[%s238 + $0x48] sm:$0xff]
    %v249 = vld [vmem:[%s238 + $0x50] sm:$0xff]
    %v250 = vld [vmem:[%s238 + $0x58] sm:$0xff]
    %v251 = vld [vmem:[%s238 + $0x60] sm:$0xff]
    %v252 = vld [vmem:[%s238 + $0x68] sm:$0xff]
    %v253 = vld [vmem:[%s238 + $0x70] sm:$0xff]
    %v254 = vld [vmem:[%s238 + $0x78] sm:$0xff]
    %255 = vmatprep.subr.mxu0 0.0
    %256 = vmatpush1.msra.mxu0 %v254
    %257 = vmatprep.subr.mxu0 0.0
    %258 = vmatpush1.msra.mxu0 %v253
    %259 = vmatprep.subr.mxu0 0.0
    %260 = vmatpush1.msra.mxu0 %v252
    %261 = vmatprep.subr.mxu0 0.0
    %262 = vmatpush1.msra.mxu0 %v251
    %263 = vmatprep.subr.mxu0 0.0
    %264 = vmatpush1.msra.mxu0 %v250
    %265 = vmatprep.subr.mxu0 0.0
    %266 = vmatpush1.msra.mxu0 %v249
    %267 = vmatprep.subr.mxu0 0.0
    %268 = vmatpush1.msra.mxu0 %v248
    %269 = vmatprep.subr.mxu0 0.0
    %270 = vmatpush1.msra.mxu0 %v247
    %271 = vmatprep.subr.mxu0 0.0
    %272 = vmatpush1.msra.mxu0 %v246
    %273 = vmatprep.subr.mxu0 0.0
    %274 = vmatpush1.msra.mxu0 %v245
    %275 = vmatprep.subr.mxu0 0.0
    %276 = vmatpush1.msra.mxu0 %v244
    %277 = vmatprep.subr.mxu0 0.0
    %278 = vmatpush1.msra.mxu0 %v243
    %279 = vmatprep.subr.mxu0 0.0
    %280 = vmatpush1.msra.mxu0 %v242
    %281 = vmatprep.subr.mxu0 0.0
    %282 = vmatpush1.msra.mxu0 %v241
    %283 = vmatprep.subr.mxu0 0.0
    %284 = vmatpush1.msra.mxu0 %v240
    %285 = vmatprep.subr.mxu0 0.0
    %286 = vmatpush1.msra.mxu0 %v239
    %287 = vmatprep.subr.mxu0 0.0
    %288 = vmatpush2.msra.mxu0 0.0
    %289 = vmatprep.subr.mxu0 0.0
    %290 = vmatpush2.msra.mxu0 0.0
    %291 = vmatprep.subr.mxu0 0.0
    %292 = vmatpush2.msra.mxu0 0.0
    %293 = vmatprep.subr.mxu0 0.0
    %294 = vmatpush2.msra.mxu0 0.0
    %295 = vmatprep.subr.mxu0 0.0
    %296 = vmatpush2.msra.mxu0 0.0
    %297 = vmatprep.subr.mxu0 0.0
    %298 = vmatpush2.msra.mxu0 0.0
    %299 = vmatprep.subr.mxu0 0.0
    %300 = vmatpush2.msra.mxu0 0.0
    %301 = vmatprep.subr.mxu0 0.0
    %302 = vmatpush2.msra.mxu0 0.0
    %303 = vmatprep.subr.mxu0 0.0
    %304 = vmatpush2.msra.mxu0 0.0
    %305 = vmatprep.subr.mxu0 0.0
    %306 = vmatpush2.msra.mxu0 0.0
    %307 = vmatprep.subr.mxu0 0.0
    %308 = vmatpush2.msra.mxu0 0.0
    %309 = vmatprep.subr.mxu0 0.0
    %310 = vmatpush2.msra.mxu0 0.0
    %311 = vmatprep.subr.mxu0 0.0
    %312 = vmatpush2.msra.mxu0 0.0
    %313 = vmatprep.subr.mxu0 0.0
    %314 = vmatpush2.msra.mxu0 0.0
    %315 = vmatprep.subr.mxu0 0.0
    %316 = vmatpush2.msra.mxu0 0.0
    %317 = vmatprep.subr.mxu0 0.0
    %318 = vmatpush2.msra.mxu0 0.0
    %319 = vmatprep.mubr.f32.mxu0 0.0
    %320 = vmatmul.mubr.f32.gmra.mxu0 %v236
    %v321 = vpop.f32.mrf.mxu0
    %v322 = vadd.f32 0.0, %v321
    %v323 = vpop.f32.mrf.mxu0
    %324 = vmatprep.mubr.f32.mxu0 0.0
    %325 = vmatmul.mubr.f32.gmra.mxu0 %v237
    %v326 = vpop.f32.mrf.mxu0
    %v327 = vadd.f32 0.0, %v326
    %v328 = vpop.f32.mrf.mxu0
    %329 = vdwg.mxu0
    %v330 = vadd.f32 %v228, %v322
    %v331 = vadd.f32 %v233, %v327
    %v332 = vadd.f32 %v330, %v331
    %v333 = vrot.slane %v332, 4
    %v334 = vadd.f32 %v332, %v333
    %v335 = vrot.slane %v334, 2
    %v336 = vadd.f32 %v334, %v335
    %v337 = vrot.slane %v336, 1
    %v338 = vadd.f32 %v336, %v337
    %v339 = vmul.f32 %v330, %v330
    %v340 = vmul.f32 %v331, %v331
    %v341 = vadd.f32 %v339, %v340
    %v342 = vrot.slane %v341, 4
    %v343 = vadd.f32 %v341, %v342
    %v344 = vrot.slane %v343, 2
    %v345 = vadd.f32 %v343, %v344
    %v346 = vrot.slane %v345, 1
    %v347 = vadd.f32 %v345, %v346
    %vm348 = vcmask 1040384
    %v349 = vsel %vm348, %v338, %v347
    %v350 = vld [vmem:[%s2] sm:$0xff]
    %v351 = vld [vmem:[%s2 + $0x8] sm:$0xff]
    %v352 = vld [vmem:[%s2 + $0x10] sm:$0xff]
    %v353 = vld [vmem:[%s2 + $0x18] sm:$0xff]
    %v354 = vld [vmem:[%s2 + $0x20] sm:$0xff]
    %v355 = vld [vmem:[%s2 + $0x28] sm:$0xff]
    %v356 = vld [vmem:[%s2 + $0x30] sm:$0xff]
    %v357 = vld [vmem:[%s2 + $0x38] sm:$0xff]
    %v358 = vld [vmem:[%s2 + $0x40] sm:$0xff]
    %v359 = vld [vmem:[%s2 + $0x48] sm:$0xff]
    %v360 = vld [vmem:[%s2 + $0x50] sm:$0xff]
    %v361 = vld [vmem:[%s2 + $0x58] sm:$0xff]
    %v362 = vld [vmem:[%s2 + $0x60] sm:$0xff]
    %v363 = vld [vmem:[%s2 + $0x68] sm:$0xff]
    %v364 = vld [vmem:[%s2 + $0x70] sm:$0xff]
    %v365 = vld [vmem:[%s2 + $0x78] sm:$0xff]
    %366 = vmatprep.subr.mxu0 0.0
    %367 = vmatpush1.msra.mxu0 %v365
    %368 = vmatprep.subr.mxu0 0.0
    %369 = vmatpush1.msra.mxu0 %v364
    %370 = vmatprep.subr.mxu0 0.0
    %371 = vmatpush1.msra.mxu0 %v363
    %372 = vmatprep.subr.mxu0 0.0
    %373 = vmatpush1.msra.mxu0 %v362
    %374 = vmatprep.subr.mxu0 0.0
    %375 = vmatpush1.msra.mxu0 %v361
    %376 = vmatprep.subr.mxu0 0.0
    %377 = vmatpush1.msra.mxu0 %v360
    %378 = vmatprep.subr.mxu0 0.0
    %379 = vmatpush1.msra.mxu0 %v359
    %380 = vmatprep.subr.mxu0 0.0
    %381 = vmatpush1.msra.mxu0 %v358
    %382 = vmatprep.subr.mxu0 0.0
    %383 = vmatpush1.msra.mxu0 %v357
    %384 = vmatprep.subr.mxu0 0.0
    %385 = vmatpush1.msra.mxu0 %v356
    %386 = vmatprep.subr.mxu0 0.0
    %387 = vmatpush1.msra.mxu0 %v355
    %388 = vmatprep.subr.mxu0 0.0
    %389 = vmatpush1.msra.mxu0 %v354
    %390 = vmatprep.subr.mxu0 0.0
    %391 = vmatpush1.msra.mxu0 %v353
    %392 = vmatprep.subr.mxu0 0.0
    %393 = vmatpush1.msra.mxu0 %v352
    %394 = vmatprep.subr.mxu0 0.0
    %395 = vmatpush1.msra.mxu0 %v351
    %396 = vmatprep.subr.mxu0 0.0
    %397 = vmatpush1.msra.mxu0 %v350
    %398 = vmatprep.subr.mxu0 0.0
    %399 = vmatpush2.msra.mxu0 0.0
    %400 = vmatprep.subr.mxu0 0.0
    %401 = vmatpush2.msra.mxu0 0.0
    %402 = vmatprep.subr.mxu0 0.0
    %403 = vmatpush2.msra.mxu0 0.0
    %404 = vmatprep.subr.mxu0 0.0
    %405 = vmatpush2.msra.mxu0 0.0
    %406 = vmatprep.subr.mxu0 0.0
    %407 = vmatpush2.msra.mxu0 0.0
    %408 = vmatprep.subr.mxu0 0.0
    %409 = vmatpush2.msra.mxu0 0.0
    %410 = vmatprep.subr.mxu0 0.0
    %411 = vmatpush2.msra.mxu0 0.0
    %412 = vmatprep.subr.mxu0 0.0
    %413 = vmatpush2.msra.mxu0 0.0
    %414 = vmatprep.subr.mxu0 0.0
    %415 = vmatpush2.msra.mxu0 0.0
    %416 = vmatprep.subr.mxu0 0.0
    %417 = vmatpush2.msra.mxu0 0.0
    %418 = vmatprep.subr.mxu0 0.0
    %419 = vmatpush2.msra.mxu0 0.0
    %420 = vmatprep.subr.mxu0 0.0
    %421 = vmatpush2.msra.mxu0 0.0
    %422 = vmatprep.subr.mxu0 0.0
    %423 = vmatpush2.msra.mxu0 0.0
    %424 = vmatprep.subr.mxu0 0.0
    %425 = vmatpush2.msra.mxu0 0.0
    %426 = vmatprep.subr.mxu0 0.0
    %427 = vmatpush2.msra.mxu0 0.0
    %428 = vmatprep.subr.mxu0 0.0
    %429 = vmatpush2.msra.mxu0 0.0
    %430 = vmatprep.mubr.f32.mxu0 0.0
    %431 = vmatmul.mubr.f32.gmra.mxu0 %v349
    %v432 = vpop.f32.mrf.mxu0
    %v433 = vadd.f32 0.0, %v432
    %v434 = vpop.f32.mrf.mxu0
    %435 = vdwg.mxu0
    %v436 = vmul.f32 %v433, 0.001953125
    %v437 = vmul.f32 %v436, %v436
    %v439 = vrot.slane %v437, 7
    %v441 = vsub.f32 %v436, %v439
    %v442 = vld [vmem:[%s4] sm:$0x1]
    %v443 = vadd.f32 %v441, 1e-05
    %v444 = vrsqrt.pop %v443
    %v446 = vrot.slane %v444, 1
    %v448 = vmul.f32 %v442, %v446
    %v449 = vld [vmem:[%s4 + $0x1] sm:$0x1]
    %v450 = vmul.f32 %v436, %v448
    %v451 = vsub.f32 %v449, %v450
    %v453 = vrot.slane %v451, 7
    %v455 = vsel %vm348, %v448, %v453
    %v456 = vld [vmem:[%s3] sm:$0xf]
    %vm457 = vcmask 31744
    %v459 = vsel %vm457, %v455, 0
    %vm461 = vcmask 1043456
    %v463 = vsel %vm461, %v456, 0
    %465 = vmatprep.subr.mxu0 0.0
    %466 = vmatpush1.msra.mxu0 0.0
    %467 = vmatprep.subr.mxu0 0.0
    %468 = vmatpush1.msra.mxu0 0.0
    %469 = vmatprep.subr.mxu0 0.0
    %470 = vmatpush1.msra.mxu0 0.0
    %471 = vmatprep.subr.mxu0 0.0
    %472 = vmatpush1.msra.mxu0 0.0
    %473 = vmatprep.subr.mxu0 0.0
    %474 = vmatpush1.msra.mxu0 0.0
    %475 = vmatprep.subr.mxu0 0.0
    %476 = vmatpush1.msra.mxu0 0.0
    %477 = vmatprep.subr.mxu0 0.0
    %478 = vmatpush1.msra.mxu0 0.0
    %479 = vmatprep.subr.mxu0 0.0
    %480 = vmatpush1.msra.mxu0 0.0
    %481 = vmatprep.subr.mxu0 0.0
    %482 = vmatpush1.msra.mxu0 0.0
    %483 = vmatprep.subr.mxu0 0.0
    %484 = vmatpush1.msra.mxu0 0.0
    %485 = vmatprep.subr.mxu0 0.0
    %486 = vmatpush1.msra.mxu0 0.0
    %487 = vmatprep.subr.mxu0 0.0
    %488 = vmatpush1.msra.mxu0 0.0
    %489 = vmatprep.subr.mxu0 0.0
    %490 = vmatpush1.msra.mxu0 0.0
    %491 = vmatprep.subr.mxu0 0.0
    %492 = vmatpush1.msra.mxu0 0.0
    %493 = vmatprep.subr.mxu0 0.0
    %494 = vmatpush1.msra.mxu0 0.0
    %495 = vmatprep.subr.mxu0 0.0
    %496 = vmatpush1.msra.mxu0 %v463
    %497 = vmatprep.subr.mxu0 0.0
    %498 = vmatpush2.msra.mxu0 0.0
    %499 = vmatprep.subr.mxu0 0.0
    %500 = vmatpush2.msra.mxu0 0.0
    %501 = vmatprep.subr.mxu0 0.0
    %502 = vmatpush2.msra.mxu0 0.0
    %503 = vmatprep.subr.mxu0 0.0
    %504 = vmatpush2.msra.mxu0 0.0
    %505 = vmatprep.subr.mxu0 0.0
    %506 = vmatpush2.msra.mxu0 0.0
    %507 = vmatprep.subr.mxu0 0.0
    %508 = vmatpush2.msra.mxu0 0.0
    %509 = vmatprep.subr.mxu0 0.0
    %510 = vmatpush2.msra.mxu0 0.0
    %511 = vmatprep.subr.mxu0 0.0
    %512 = vmatpush2.msra.mxu0 0.0
    %513 = vmatprep.subr.mxu0 0.0
    %514 = vmatpush2.msra.mxu0 0.0
    %515 = vmatprep.subr.mxu0 0.0
    %516 = vmatpush2.msra.mxu0 0.0
    %517 = vmatprep.subr.mxu0 0.0
    %518 = vmatpush2.msra.mxu0 0.0
    %519 = vmatprep.subr.mxu0 0.0
    %520 = vmatpush2.msra.mxu0 0.0
    %521 = vmatprep.subr.mxu0 0.0
    %522 = vmatpush2.msra.mxu0 0.0
    %523 = vmatprep.subr.mxu0 0.0
    %524 = vmatpush2.msra.mxu0 0.0
    %525 = vmatprep.subr.mxu0 0.0
    %526 = vmatpush2.msra.mxu0 0.0
    %527 = vmatprep.subr.mxu0 0.0
    %528 = vmatpush2.msra.mxu0 0.0
    %529 = vmatprep.mubr.f32.mxu0 0.0
    %530 = vmatmul.mubr.f32.gmra.mxu0 %v459
    %v531 = vpop.f32.mrf.mxu0
    %v532 = vadd.f32 0.0, %v531
    %v533 = vpop.f32.mrf.mxu0
    %534 = vdwg.mxu0
    %v535 = vlaneseq
    %v536 = vshrl.u32 %v535, 7
    %v537 = vsub.s32 0, %v536
    %v538 = vrot.slane %v532, %v537
    %v539 = vmul.f32 %v330, %v538
    %v540 = vmul.f32 %v331, %v538
    %v541 = vlaneseq
    %v542 = vshrl.u32 %v541, 7
    %v543 = vsub.s32 1, %v542
    %v544 = vrot.slane %v532, %v543
    %v545 = vadd.f32 %v539, %v544
    %v546 = vadd.f32 %v540, %v544
    %v547 = vmax.f32 %v545, 0.0
    %v548 = vmax.f32 %v546, 0.0
    %549 = vst [vmem:[#allocation6] sm:$0xff] %v547
    %550 = vst [vmem:[#allocation6 + $0x8] sm:$0xff] %v548
    %v551 = vld [vmem:[%s0] sm:$0xff]
    %v552 = vld [vmem:[%s0 + $0x8] sm:$0xff]
    %v553 = vld [vmem:[#allocation6] sm:$0xff]
    %v554 = vld [vmem:[#allocation6 + $0x8] sm:$0xff]
    %v555 = vadd.f32 %v551, %v553
    %v556 = vadd.f32 %v552, %v554
    %557 = vst [vmem:[#allocation2 + $0x8] sm:$0xff] %v555
    %558 = vst [vmem:[#allocation2 + $0x10] sm:$0xff] %v556
    %v559 = vld [vmem:[#allocation2 + $0x7] sm:$0xff]
    %v560 = vld [vmem:[#allocation2 + $0xf] sm:$0xff]
    %v561 = vld [vmem:[#allocation3] sm:$0xff]
    %v562 = vld [vmem:[#allocation3 + $0x8] sm:$0xff]
    %v563 = vld [vmem:[#allocation3 + $0x10] sm:$0xff]
    %v564 = vld [vmem:[#allocation3 + $0x18] sm:$0xff]
    %v565 = vld [vmem:[#allocation3 + $0x20] sm:$0xff]
    %v566 = vld [vmem:[#allocation3 + $0x28] sm:$0xff]
    %v567 = vld [vmem:[#allocation3 + $0x30] sm:$0xff]
    %v568 = vld [vmem:[#allocation3 + $0x38] sm:$0xff]
    %v569 = vld [vmem:[#allocation3 + $0x40] sm:$0xff]
    %v570 = vld [vmem:[#allocation3 + $0x48] sm:$0xff]
    %v571 = vld [vmem:[#allocation3 + $0x50] sm:$0xff]
    %v572 = vld [vmem:[#allocation3 + $0x58] sm:$0xff]
    %v573 = vld [vmem:[#allocation3 + $0x60] sm:$0xff]
    %v574 = vld [vmem:[#allocation3 + $0x68] sm:$0xff]
    %v575 = vld [vmem:[#allocation3 + $0x70] sm:$0xff]
    %v576 = vld [vmem:[#allocation3 + $0x78] sm:$0xff]
    %v577 = vld [vmem:[#allocation2 + $0x8] sm:$0xff]
    %v578 = vld [vmem:[#allocation2 + $0x10] sm:$0xff]
    %v579 = vld [vmem:[%s69] sm:$0xff]
    %v580 = vld [vmem:[%s69 + $0x8] sm:$0xff]
    %v581 = vld [vmem:[%s69 + $0x10] sm:$0xff]
    %v582 = vld [vmem:[%s69 + $0x18] sm:$0xff]
    %v583 = vld [vmem:[%s69 + $0x20] sm:$0xff]
    %v584 = vld [vmem:[%s69 + $0x28] sm:$0xff]
    %v585 = vld [vmem:[%s69 + $0x30] sm:$0xff]
    %v586 = vld [vmem:[%s69 + $0x38] sm:$0xff]
    %v587 = vld [vmem:[%s69 + $0x40] sm:$0xff]
    %v588 = vld [vmem:[%s69 + $0x48] sm:$0xff]
    %v589 = vld [vmem:[%s69 + $0x50] sm:$0xff]
    %v590 = vld [vmem:[%s69 + $0x58] sm:$0xff]
    %v591 = vld [vmem:[%s69 + $0x60] sm:$0xff]
    %v592 = vld [vmem:[%s69 + $0x68] sm:$0xff]
    %v593 = vld [vmem:[%s69 + $0x70] sm:$0xff]
    %v594 = vld [vmem:[%s69 + $0x78] sm:$0xff]
    %595 = vmatprep.subr.mxu0 0.0
    %596 = vmatpush1.msra.mxu0 %v594
    %597 = vmatprep.subr.mxu0 0.0
    %598 = vmatpush1.msra.mxu0 %v593
    %599 = vmatprep.subr.mxu0 0.0
    %600 = vmatpush1.msra.mxu0 %v592
    %601 = vmatprep.subr.mxu0 0.0
    %602 = vmatpush1.msra.mxu0 %v591
    %603 = vmatprep.subr.mxu0 0.0
    %604 = vmatpush1.msra.mxu0 %v590
    %605 = vmatprep.subr.mxu0 0.0
    %606 = vmatpush1.msra.mxu0 %v589
    %607 = vmatprep.subr.mxu0 0.0
    %608 = vmatpush1.msra.mxu0 %v588
    %609 = vmatprep.subr.mxu0 0.0
    %610 = vmatpush1.msra.mxu0 %v587
    %611 = vmatprep.subr.mxu0 0.0
    %612 = vmatpush1.msra.mxu0 %v586
    %613 = vmatprep.subr.mxu0 0.0
    %614 = vmatpush1.msra.mxu0 %v585
    %615 = vmatprep.subr.mxu0 0.0
    %616 = vmatpush1.msra.mxu0 %v584
    %617 = vmatprep.subr.mxu0 0.0
    %618 = vmatpush1.msra.mxu0 %v583
    %619 = vmatprep.subr.mxu0 0.0
    %620 = vmatpush1.msra.mxu0 %v582
    %621 = vmatprep.subr.mxu0 0.0
    %622 = vmatpush1.msra.mxu0 %v581
    %623 = vmatprep.subr.mxu0 0.0
    %624 = vmatpush1.msra.mxu0 %v580
    %625 = vmatprep.subr.mxu0 0.0
    %626 = vmatpush1.msra.mxu0 %v579
    %627 = vmatprep.subr.mxu0 0.0
    %628 = vmatpush2.msra.mxu0 0.0
    %629 = vmatprep.subr.mxu0 0.0
    %630 = vmatpush2.msra.mxu0 0.0
    %631 = vmatprep.subr.mxu0 0.0
    %632 = vmatpush2.msra.mxu0 0.0
    %633 = vmatprep.subr.mxu0 0.0
    %634 = vmatpush2.msra.mxu0 0.0
    %635 = vmatprep.subr.mxu0 0.0
    %636 = vmatpush2.msra.mxu0 0.0
    %637 = vmatprep.subr.mxu0 0.0
    %638 = vmatpush2.msra.mxu0 0.0
    %639 = vmatprep.subr.mxu0 0.0
    %640 = vmatpush2.msra.mxu0 0.0
    %641 = vmatprep.subr.mxu0 0.0
    %642 = vmatpush2.msra.mxu0 0.0
    %643 = vmatprep.subr.mxu0 0.0
    %644 = vmatpush2.msra.mxu0 0.0
    %645 = vmatprep.subr.mxu0 0.0
    %646 = vmatpush2.msra.mxu0 0.0
    %647 = vmatprep.subr.mxu0 0.0
    %648 = vmatpush2.msra.mxu0 0.0
    %649 = vmatprep.subr.mxu0 0.0
    %650 = vmatpush2.msra.mxu0 0.0
    %651 = vmatprep.subr.mxu0 0.0
    %652 = vmatpush2.msra.mxu0 0.0
    %653 = vmatprep.subr.mxu0 0.0
    %654 = vmatpush2.msra.mxu0 0.0
    %655 = vmatprep.subr.mxu0 0.0
    %656 = vmatpush2.msra.mxu0 0.0
    %657 = vmatprep.subr.mxu0 0.0
    %658 = vmatpush2.msra.mxu0 0.0
    %659 = vmatprep.mubr.f32.mxu0 0.0
    %660 = vmatmul.mubr.f32.gmra.mxu0 %v577
    %v661 = vpop.f32.mrf.mxu0
    %v662 = vadd.f32 0.0, %v661
    %v663 = vpop.f32.mrf.mxu0
    %664 = vmatprep.mubr.f32.mxu0 0.0
    %665 = vmatmul.mubr.f32.gmra.mxu0 %v578
    %v666 = vpop.f32.mrf.mxu0
    %v667 = vadd.f32 0.0, %v666
    %v668 = vpop.f32.mrf.mxu0
    %669 = vdwg.mxu0
    %670 = vmatprep.subr.mxu0 0.0
    %671 = vmatpush1.msra.mxu0 %v576
    %672 = vmatprep.subr.mxu0 0.0
    %673 = vmatpush1.msra.mxu0 %v575
    %674 = vmatprep.subr.mxu0 0.0
    %675 = vmatpush1.msra.mxu0 %v574
    %676 = vmatprep.subr.mxu0 0.0
    %677 = vmatpush1.msra.mxu0 %v573
    %678 = vmatprep.subr.mxu0 0.0
    %679 = vmatpush1.msra.mxu0 %v572
    %680 = vmatprep.subr.mxu0 0.0
    %681 = vmatpush1.msra.mxu0 %v571
    %682 = vmatprep.subr.mxu0 0.0
    %683 = vmatpush1.msra.mxu0 %v570
    %684 = vmatprep.subr.mxu0 0.0
    %685 = vmatpush1.msra.mxu0 %v569
    %686 = vmatprep.subr.mxu0 0.0
    %687 = vmatpush1.msra.mxu0 %v568
    %688 = vmatprep.subr.mxu0 0.0
    %689 = vmatpush1.msra.mxu0 %v567
    %690 = vmatprep.subr.mxu0 0.0
    %691 = vmatpush1.msra.mxu0 %v566
    %692 = vmatprep.subr.mxu0 0.0
    %693 = vmatpush1.msra.mxu0 %v565
    %694 = vmatprep.subr.mxu0 0.0
    %695 = vmatpush1.msra.mxu0 %v564
    %696 = vmatprep.subr.mxu0 0.0
    %697 = vmatpush1.msra.mxu0 %v563
    %698 = vmatprep.subr.mxu0 0.0
    %699 = vmatpush1.msra.mxu0 %v562
    %700 = vmatprep.subr.mxu0 0.0
    %701 = vmatpush1.msra.mxu0 %v561
    %702 = vmatprep.subr.mxu0 0.0
    %703 = vmatpush2.msra.mxu0 0.0
    %704 = vmatprep.subr.mxu0 0.0
    %705 = vmatpush2.msra.mxu0 0.0
    %706 = vmatprep.subr.mxu0 0.0
    %707 = vmatpush2.msra.mxu0 0.0
    %708 = vmatprep.subr.mxu0 0.0
    %709 = vmatpush2.msra.mxu0 0.0
    %710 = vmatprep.subr.mxu0 0.0
    %711 = vmatpush2.msra.mxu0 0.0
    %712 = vmatprep.subr.mxu0 0.0
    %713 = vmatpush2.msra.mxu0 0.0
    %714 = vmatprep.subr.mxu0 0.0
    %715 = vmatpush2.msra.mxu0 0.0
    %716 = vmatprep.subr.mxu0 0.0
    %717 = vmatpush2.msra.mxu0 0.0
    %718 = vmatprep.subr.mxu0 0.0
    %719 = vmatpush2.msra.mxu0 0.0
    %720 = vmatprep.subr.mxu0 0.0
    %721 = vmatpush2.msra.mxu0 0.0
    %722 = vmatprep.subr.mxu0 0.0
    %723 = vmatpush2.msra.mxu0 0.0
    %724 = vmatprep.subr.mxu0 0.0
    %725 = vmatpush2.msra.mxu0 0.0
    %726 = vmatprep.subr.mxu0 0.0
    %727 = vmatpush2.msra.mxu0 0.0
    %728 = vmatprep.subr.mxu0 0.0
    %729 = vmatpush2.msra.mxu0 0.0
    %730 = vmatprep.subr.mxu0 0.0
    %731 = vmatpush2.msra.mxu0 0.0
    %732 = vmatprep.subr.mxu0 0.0
    %733 = vmatpush2.msra.mxu0 0.0
    %734 = vmatprep.mubr.f32.mxu0 0.0
    %735 = vmatmul.mubr.f32.gmra.mxu0 %v559
    %v736 = vpop.f32.mrf.mxu0
    %v737 = vadd.f32 %v662, %v736
    %v738 = vpop.f32.mrf.mxu0
    %739 = vmatprep.mubr.f32.mxu0 0.0
    %740 = vmatmul.mubr.f32.gmra.mxu0 %v560
    %v741 = vpop.f32.mrf.mxu0
    %v742 = vadd.f32 %v667, %v741
    %v743 = vpop.f32.mrf.mxu0
    %744 = vdwg.mxu0
    %v745 = vld [vmem:[#allocation2 + $0x9] sm:$0xff]
    %v746 = vld [vmem:[#allocation2 + $0x11] sm:$0xff]
    %v747 = vld [vmem:[%s238] sm:$0xff]
    %v748 = vld [vmem:[%s238 + $0x8] sm:$0xff]
    %v749 = vld [vmem:[%s238 + $0x10] sm:$0xff]
    %v750 = vld [vmem:[%s238 + $0x18] sm:$0xff]
    %v751 = vld [vmem:[%s238 + $0x20] sm:$0xff]
    %v752 = vld [vmem:[%s238 + $0x28] sm:$0xff]
    %v753 = vld [vmem:[%s238 + $0x30] sm:$0xff]
    %v754 = vld [vmem:[%s238 + $0x38] sm:$0xff]
    %v755 = vld [vmem:[%s238 + $0x40] sm:$0xff]
    %v756 = vld [vmem:[%s238 + $0x48] sm:$0xff]
    %v757 = vld [vmem:[%s238 + $0x50] sm:$0xff]
    %v758 = vld [vmem:[%s238 + $0x58] sm:$0xff]
    %v759 = vld [vmem:[%s238 + $0x60] sm:$0xff]
    %v760 = vld [vmem:[%s238 + $0x68] sm:$0xff]
    %v761 = vld [vmem:[%s238 + $0x70] sm:$0xff]
    %v762 = vld [vmem:[%s238 + $0x78] sm:$0xff]
    %763 = vmatprep.subr.mxu0 0.0
    %764 = vmatpush1.msra.mxu0 %v762
    %765 = vmatprep.subr.mxu0 0.0
    %766 = vmatpush1.msra.mxu0 %v761
    %767 = vmatprep.subr.mxu0 0.0
    %768 = vmatpush1.msra.mxu0 %v760
    %769 = vmatprep.subr.mxu0 0.0
    %770 = vmatpush1.msra.mxu0 %v759
    %771 = vmatprep.subr.mxu0 0.0
    %772 = vmatpush1.msra.mxu0 %v758
    %773 = vmatprep.subr.mxu0 0.0
    %774 = vmatpush1.msra.mxu0 %v757
    %775 = vmatprep.subr.mxu0 0.0
    %776 = vmatpush1.msra.mxu0 %v756
    %777 = vmatprep.subr.mxu0 0.0
    %778 = vmatpush1.msra.mxu0 %v755
    %779 = vmatprep.subr.mxu0 0.0
    %780 = vmatpush1.msra.mxu0 %v754
    %781 = vmatprep.subr.mxu0 0.0
    %782 = vmatpush1.msra.mxu0 %v753
    %783 = vmatprep.subr.mxu0 0.0
    %784 = vmatpush1.msra.mxu0 %v752
    %785 = vmatprep.subr.mxu0 0.0
    %786 = vmatpush1.msra.mxu0 %v751
    %787 = vmatprep.subr.mxu0 0.0
    %788 = vmatpush1.msra.mxu0 %v750
    %789 = vmatprep.subr.mxu0 0.0
    %790 = vmatpush1.msra.mxu0 %v749
    %791 = vmatprep.subr.mxu0 0.0
    %792 = vmatpush1.msra.mxu0 %v748
    %793 = vmatprep.subr.mxu0 0.0
    %794 = vmatpush1.msra.mxu0 %v747
    %795 = vmatprep.subr.mxu0 0.0
    %796 = vmatpush2.msra.mxu0 0.0
    %797 = vmatprep.subr.mxu0 0.0
    %798 = vmatpush2.msra.mxu0 0.0
    %799 = vmatprep.subr.mxu0 0.0
    %800 = vmatpush2.msra.mxu0 0.0
    %801 = vmatprep.subr.mxu0 0.0
    %802 = vmatpush2.msra.mxu0 0.0
    %803 = vmatprep.subr.mxu0 0.0
    %804 = vmatpush2.msra.mxu0 0.0
    %805 = vmatprep.subr.mxu0 0.0
    %806 = vmatpush2.msra.mxu0 0.0
    %807 = vmatprep.subr.mxu0 0.0
    %808 = vmatpush2.msra.mxu0 0.0
    %809 = vmatprep.subr.mxu0 0.0
    %810 = vmatpush2.msra.mxu0 0.0
    %811 = vmatprep.subr.mxu0 0.0
    %812 = vmatpush2.msra.mxu0 0.0
    %813 = vmatprep.subr.mxu0 0.0
    %814 = vmatpush2.msra.mxu0 0.0
    %815 = vmatprep.subr.mxu0 0.0
    %816 = vmatpush2.msra.mxu0 0.0
    %817 = vmatprep.subr.mxu0 0.0
    %818 = vmatpush2.msra.mxu0 0.0
    %819 = vmatprep.subr.mxu0 0.0
    %820 = vmatpush2.msra.mxu0 0.0
    %821 = vmatprep.subr.mxu0 0.0
    %822 = vmatpush2.msra.mxu0 0.0
    %823 = vmatprep.subr.mxu0 0.0
    %824 = vmatpush2.msra.mxu0 0.0
    %825 = vmatprep.subr.mxu0 0.0
    %826 = vmatpush2.msra.mxu0 0.0
    %827 = vmatprep.mubr.f32.mxu0 0.0
    %828 = vmatmul.mubr.f32.gmra.mxu0 %v745
    %v829 = vpop.f32.mrf.mxu0
    %v830 = vadd.f32 0.0, %v829
    %v831 = vpop.f32.mrf.mxu0
    %832 = vmatprep.mubr.f32.mxu0 0.0
    %833 = vmatmul.mubr.f32.gmra.mxu0 %v746
    %v834 = vpop.f32.mrf.mxu0
    %v835 = vadd.f32 0.0, %v834
    %v836 = vpop.f32.mrf.mxu0
    %837 = vdwg.mxu0
    %v838 = vadd.f32 %v737, %v830
    %v839 = vadd.f32 %v742, %v835
    %v840 = vadd.f32 %v838, %v839
    %v841 = vrot.slane %v840, 4
    %v842 = vadd.f32 %v840, %v841
    %v843 = vrot.slane %v842, 2
    %v844 = vadd.f32 %v842, %v843
    %v845 = vrot.slane %v844, 1
    %v846 = vadd.f32 %v844, %v845
    %v847 = vmul.f32 %v838, %v838
    %v848 = vmul.f32 %v839, %v839
    %v849 = vadd.f32 %v847, %v848
    %v850 = vrot.slane %v849, 4
    %v851 = vadd.f32 %v849, %v850
    %v852 = vrot.slane %v851, 2
    %v853 = vadd.f32 %v851, %v852
    %v854 = vrot.slane %v853, 1
    %v855 = vadd.f32 %v853, %v854
    %v856 = vsel %vm348, %v846, %v855
    %v857 = vld [vmem:[%s2] sm:$0xff]
    %v858 = vld [vmem:[%s2 + $0x8] sm:$0xff]
    %v859 = vld [vmem:[%s2 + $0x10] sm:$0xff]
    %v860 = vld [vmem:[%s2 + $0x18] sm:$0xff]
    %v861 = vld [vmem:[%s2 + $0x20] sm:$0xff]
    %v862 = vld [vmem:[%s2 + $0x28] sm:$0xff]
    %v863 = vld [vmem:[%s2 + $0x30] sm:$0xff]
    %v864 = vld [vmem:[%s2 + $0x38] sm:$0xff]
    %v865 = vld [vmem:[%s2 + $0x40] sm:$0xff]
    %v866 = vld [vmem:[%s2 + $0x48] sm:$0xff]
    %v867 = vld [vmem:[%s2 + $0x50] sm:$0xff]
    %v868 = vld [vmem:[%s2 + $0x58] sm:$0xff]
    %v869 = vld [vmem:[%s2 + $0x60] sm:$0xff]
    %v870 = vld [vmem:[%s2 + $0x68] sm:$0xff]
    %v871 = vld [vmem:[%s2 + $0x70] sm:$0xff]
    %v872 = vld [vmem:[%s2 + $0x78] sm:$0xff]
    %873 = vmatprep.subr.mxu0 0.0
    %874 = vmatpush1.msra.mxu0 %v872
    %875 = vmatprep.subr.mxu0 0.0
    %876 = vmatpush1.msra.mxu0 %v871
    %877 = vmatprep.subr.mxu0 0.0
    %878 = vmatpush1.msra.mxu0 %v870
    %879 = vmatprep.subr.mxu0 0.0
    %880 = vmatpush1.msra.mxu0 %v869
    %881 = vmatprep.subr.mxu0 0.0
    %882 = vmatpush1.msra.mxu0 %v868
    %883 = vmatprep.subr.mxu0 0.0
    %884 = vmatpush1.msra.mxu0 %v867
    %885 = vmatprep.subr.mxu0 0.0
    %886 = vmatpush1.msra.mxu0 %v866
    %887 = vmatprep.subr.mxu0 0.0
    %888 = vmatpush1.msra.mxu0 %v865
    %889 = vmatprep.subr.mxu0 0.0
    %890 = vmatpush1.msra.mxu0 %v864
    %891 = vmatprep.subr.mxu0 0.0
    %892 = vmatpush1.msra.mxu0 %v863
    %893 = vmatprep.subr.mxu0 0.0
    %894 = vmatpush1.msra.mxu0 %v862
    %895 = vmatprep.subr.mxu0 0.0
    %896 = vmatpush1.msra.mxu0 %v861
    %897 = vmatprep.subr.mxu0 0.0
    %898 = vmatpush1.msra.mxu0 %v860
    %899 = vmatprep.subr.mxu0 0.0
    %900 = vmatpush1.msra.mxu0 %v859
    %901 = vmatprep.subr.mxu0 0.0
    %902 = vmatpush1.msra.mxu0 %v858
    %903 = vmatprep.subr.mxu0 0.0
    %904 = vmatpush1.msra.mxu0 %v857
    %905 = vmatprep.subr.mxu0 0.0
    %906 = vmatpush2.msra.mxu0 0.0
    %907 = vmatprep.subr.mxu0 0.0
    %908 = vmatpush2.msra.mxu0 0.0
    %909 = vmatprep.subr.mxu0 0.0
    %910 = vmatpush2.msra.mxu0 0.0
    %911 = vmatprep.subr.mxu0 0.0
    %912 = vmatpush2.msra.mxu0 0.0
    %913 = vmatprep.subr.mxu0 0.0
    %914 = vmatpush2.msra.mxu0 0.0
    %915 = vmatprep.subr.mxu0 0.0
    %916 = vmatpush2.msra.mxu0 0.0
    %917 = vmatprep.subr.mxu0 0.0
    %918 = vmatpush2.msra.mxu0 0.0
    %919 = vmatprep.subr.mxu0 0.0
    %920 = vmatpush2.msra.mxu0 0.0
    %921 = vmatprep.subr.mxu0 0.0
    %922 = vmatpush2.msra.mxu0 0.0
    %923 = vmatprep.subr.mxu0 0.0
    %924 = vmatpush2.msra.mxu0 0.0
    %925 = vmatprep.subr.mxu0 0.0
    %926 = vmatpush2.msra.mxu0 0.0
    %927 = vmatprep.subr.mxu0 0.0
    %928 = vmatpush2.msra.mxu0 0.0
    %929 = vmatprep.subr.mxu0 0.0
    %930 = vmatpush2.msra.mxu0 0.0
    %931 = vmatprep.subr.mxu0 0.0
    %932 = vmatpush2.msra.mxu0 0.0
    %933 = vmatprep.subr.mxu0 0.0
    %934 = vmatpush2.msra.mxu0 0.0
    %935 = vmatprep.subr.mxu0 0.0
    %936 = vmatpush2.msra.mxu0 0.0
    %937 = vmatprep.mubr.f32.mxu0 0.0
    %938 = vmatmul.mubr.f32.gmra.mxu0 %v856
    %v939 = vpop.f32.mrf.mxu0
    %v940 = vadd.f32 0.0, %v939
    %v941 = vpop.f32.mrf.mxu0
    %942 = vdwg.mxu0
    %v943 = vmul.f32 %v940, 0.001953125
    %v944 = vmul.f32 %v943, %v943
    %v946 = vrot.slane %v944, 7
    %v948 = vsub.f32 %v943, %v946
    %v949 = vld [vmem:[%s4] sm:$0x1]
    %v950 = vadd.f32 %v948, 1e-05
    %v951 = vrsqrt.pop %v950
    %v953 = vrot.slane %v951, 1
    %v955 = vmul.f32 %v949, %v953
    %v956 = vld [vmem:[%s4 + $0x1] sm:$0x1]
    %v957 = vmul.f32 %v943, %v955
    %v958 = vsub.f32 %v956, %v957
    %v960 = vrot.slane %v958, 7
    %v962 = vsel %vm348, %v955, %v960
    %v963 = vld [vmem:[%s3] sm:$0xf]
    %v965 = vsel %vm457, %v962, 0
    %v968 = vsel %vm461, %v963, 0
    %970 = vmatprep.subr.mxu0 0.0
    %971 = vmatpush1.msra.mxu0 0.0
    %972 = vmatprep.subr.mxu0 0.0
    %973 = vmatpush1.msra.mxu0 0.0
    %974 = vmatprep.subr.mxu0 0.0
    %975 = vmatpush1.msra.mxu0 0.0
    %976 = vmatprep.subr.mxu0 0.0
    %977 = vmatpush1.msra.mxu0 0.0
    %978 = vmatprep.subr.mxu0 0.0
    %979 = vmatpush1.msra.mxu0 0.0
    %980 = vmatprep.subr.mxu0 0.0
    %981 = vmatpush1.msra.mxu0 0.0
    %982 = vmatprep.subr.mxu0 0.0
    %983 = vmatpush1.msra.mxu0 0.0
    %984 = vmatprep.subr.mxu0 0.0
    %985 = vmatpush1.msra.mxu0 0.0
    %986 = vmatprep.subr.mxu0 0.0
    %987 = vmatpush1.msra.mxu0 0.0
    %988 = vmatprep.subr.mxu0 0.0
    %989 = vmatpush1.msra.mxu0 0.0
    %990 = vmatprep.subr.mxu0 0.0
    %991 = vmatpush1.msra.mxu0 0.0
    %992 = vmatprep.subr.mxu0 0.0
    %993 = vmatpush1.msra.mxu0 0.0
    %994 = vmatprep.subr.mxu0 0.0
    %995 = vmatpush1.msra.mxu0 0.0
    %996 = vmatprep.subr.mxu0 0.0
    %997 = vmatpush1.msra.mxu0 0.0
    %998 = vmatprep.subr.mxu0 0.0
    %999 = vmatpush1.msra.mxu0 0.0
    %1000 = vmatprep.subr.mxu0 0.0
    %1001 = vmatpush1.msra.mxu0 %v968
    %1002 = vmatprep.subr.mxu0 0.0
    %1003 = vmatpush2.msra.mxu0 0.0
    %1004 = vmatprep.subr.mxu0 0.0
    %1005 = vmatpush2.msra.mxu0 0.0
    %1006 = vmatprep.subr.mxu0 0.0
    %1007 = vmatpush2.msra.mxu0 0.0
    %1008 = vmatprep.subr.mxu0 0.0
    %1009 = vmatpush2.msra.mxu0 0.0
    %1010 = vmatprep.subr.mxu0 0.0
    %1011 = vmatpush2.msra.mxu0 0.0
    %1012 = vmatprep.subr.mxu0 0.0
    %1013 = vmatpush2.msra.mxu0 0.0
    %1014 = vmatprep.subr.mxu0 0.0
    %1015 = vmatpush2.msra.mxu0 0.0
    %1016 = vmatprep.subr.mxu0 0.0
    %1017 = vmatpush2.msra.mxu0 0.0
    %1018 = vmatprep.subr.mxu0 0.0
    %1019 = vmatpush2.msra.mxu0 0.0
    %1020 = vmatprep.subr.mxu0 0.0
    %1021 = vmatpush2.msra.mxu0 0.0
    %1022 = vmatprep.subr.mxu0 0.0
    %1023 = vmatpush2.msra.mxu0 0.0
    %1024 = vmatprep.subr.mxu0 0.0
    %1025 = vmatpush2.msra.mxu0 0.0
    %1026 = vmatprep.subr.mxu0 0.0
    %1027 = vmatpush2.msra.mxu0 0.0
    %1028 = vmatprep.subr.mxu0 0.0
    %1029 = vmatpush2.msra.mxu0 0.0
    %1030 = vmatprep.subr.mxu0 0.0
    %1031 = vmatpush2.msra.mxu0 0.0
    %1032 = vmatprep.subr.mxu0 0.0
    %1033 = vmatpush2.msra.mxu0 0.0
    %1034 = vmatprep.mubr.f32.mxu0 0.0
    %1035 = vmatmul.mubr.f32.gmra.mxu0 %v965
    %v1036 = vpop.f32.mrf.mxu0
    %v1037 = vadd.f32 0.0, %v1036
    %v1038 = vpop.f32.mrf.mxu0
    %1039 = vdwg.mxu0
    %v1040 = vlaneseq
    %v1041 = vshrl.u32 %v1040, 7
    %v1042 = vsub.s32 0, %v1041
    %v1043 = vrot.slane %v1037, %v1042
    %v1044 = vmul.f32 %v838, %v1043
    %v1045 = vmul.f32 %v839, %v1043
    %v1046 = vlaneseq
    %v1047 = vshrl.u32 %v1046, 7
    %v1048 = vsub.s32 1, %v1047
    %v1049 = vrot.slane %v1037, %v1048
    %v1050 = vadd.f32 %v1044, %v1049
    %v1051 = vadd.f32 %v1045, %v1049
    %v1052 = vmax.f32 %v1050, 0.0
    %v1053 = vmax.f32 %v1051, 0.0
    %1054 = vst [vmem:[#allocation6] sm:$0xff] %v1052
    %1055 = vst [vmem:[#allocation6 + $0x8] sm:$0xff] %v1053
    // Predicated region
    $region26: #{tpu_custom_call.1} parent=1 // pred_check
      _
    $region27: #{tpu_custom_call.1} parent=1 // pred_check_branch
      %1057 = sbr.rel (0) target = $region29
    $region28: #{tpu_custom_call.1} parent=1 // pred_region
      %s1059 = ssub.s32 256, 256
      %1060 = vsyncadd [#allocation5], %s1059
      %s1061 = sshll.u32 [#allocation6], 4
      %s1062 = int_to_ptr.vmem [resolvable:$true] %s1061
      %1067 = dma.vmem_to_hbm [thread:$0]  %s1062, 256, %s5, [#allocation5], 128, 128, 8
    $region29: #{tpu_custom_call.1} parent=1 // pred_fallthru
      _
    // Predicated region
    $region30: #{tpu_custom_call.1} parent=1 // pred_check
      _
    $region31: #{tpu_custom_call.1} parent=1 // pred_check_branch
      %1069 = sbr.rel (0) target = $region33
    $region32: #{tpu_custom_call.1} parent=1 // pred_region
      %1070 = dma.done [#allocation5], 256
    $region33: #{tpu_custom_call.1} parent=1 // pred_fallthru
      _
    %1071 = vsyncpa [#allocation4], 1
    %1072 = vsyncpa [#allocation5], 1

</llo_original>
